<compile_context>
chip_gen: v6e
topology: v6e:2x2x1
jax: 0.10.0
libtpu: 0.0.40
codegen_flags: <defaults>
</compile_context>

<pallas_src>
import functools

import jax
import jax.numpy as jnp
from jax.experimental import pallas as pl
from jax.experimental.pallas import tpu as pltpu


def _round_up(x: int, n: int) -> int:
    return ((x + n - 1) // n) * n


def _pick_tm(m_rows: int, in_dim: int, m_channels: int,
             x_itemsize: int, out_itemsize: int,
             vmem_budget_bytes: int = 20 << 20, tm_cap: int = 16384) -> int:
    """Largest row tile (multiple of 8) whose double-buffered footprint fits."""
    # Per grid step: 2 x-tiles + 2 out-tiles (double-buffered by BlockSpec).
    per_row = 2 * in_dim * x_itemsize + 2 * m_channels * out_itemsize
    tm = tm_cap
    while tm > 8 and tm * per_row > vmem_budget_bytes:
        tm //= 2
    tm = max(tm, 8)
    if m_rows <= tm:
        if m_rows >= 1024:
            # v7x megacore: keep >= 2 row tiles so both TensorCores stream HBM.
            tm = _round_up(pl.cdiv(m_rows, 2), 8)
        else:
            tm = max(8, _round_up(m_rows, 8))
    return tm


def _kan_proj_kernel(x_ref, w_ref, b_ref, o_ref):
    # x_ref: (TM, in_dim) in compute dtype
    # w_ref: (in_dim, m_channels)  -- lane-dense [K, N] RHS, MXU-native
    # b_ref: (1, m_channels) f32   -- bias add stays f32 (VPU)
    # o_ref: (TM, m_channels) in output dtype
    acc = jnp.dot(x_ref[...], w_ref[...], preferred_element_type=jnp.float32)
    o_ref[...] = (acc + b_ref[...]).astype(o_ref.dtype)


@functools.partial(jax.jit, static_argnames=("tm", "compute_dtype", "use_pallas"))
def kan_projection(x, weight, bias, *, tm=None, compute_dtype=jnp.bfloat16,
                   use_pallas=None):
    """y = x @ weight.T + bias   (PyTorch nn.Linear semantics).

    x:      [..., in_dim]
    weight: [m_channels, in_dim]
    bias:   [m_channels]
    returns [..., m_channels]  (dtype of x)
    """
    in_dim = x.shape[-1]
    m_channels = weight.shape[0]
    lead = x.shape[:-1]
    out_dtype = x.dtype

    x2 = x.reshape(-1, in_dim)                       # (M, in_dim)
    M = x2.shape[0]

    if use_pallas is None:
        # Below ~1e5 output elements pallas_call dispatch overhead dominates;
        # XLA's native fused matmul is strictly faster there.
        use_pallas = M * m_channels >= (1 << 17)
    if not use_pallas:
        y = jnp.dot(x2, weight.T, preferred_element_type=jnp.float32)
        y = (y + bias.astype(jnp.float32)).astype(out_dtype)
        return y.reshape(*lead, m_channels)

    if compute_dtype is not None:
        # bf16 inputs + f32 accumulation ~halve input HBM traffic (mem-bound).
        x2 = x2.astype(compute_dtype)
        weight = weight.astype(compute_dtype)

    # One-time tiny XLA transpose -> lane-dense [K, N] RHS for the MXU.
    w_t = weight.T                                   # (in_dim, m_channels)
    b2 = bias.astype(jnp.float32).reshape(1, m_channels)

    x_itemsize = jnp.dtype(x2.dtype).itemsize
    out_itemsize = jnp.dtype(out_dtype).itemsize
    if tm is None:
        tm = _pick_tm(M, in_dim, m_channels, x_itemsize, out_itemsize)
    tm = max(8, _round_up(int(tm), 8))

    grid = (pl.cdiv(M, tm),)                         # ragged last tile is clipped

    # Explicit VMEM limit so the scoped default (16 MiB v5e / 32 MiB v6e,v7x)
    # never silently caps the tile; stays under v7x's 64 MiB/TC physical VMEM.
    vmem_bytes = (2 * tm * in_dim * x_itemsize
                  + 2 * tm * m_channels * out_itemsize
                  + 2 * (in_dim * m_channels * x_itemsize + m_channels * 4))
    vmem_limit = int(min(64 << 20, max(vmem_bytes + (4 << 20), 16 << 20)))

    cost = pl.CostEstimate(
        flops=2 * M * in_dim * m_channels,
        bytes_accessed=(M * in_dim * x_itemsize
                        + in_dim * m_channels * x_itemsize
                        + m_channels * 4
                        + M * m_channels * out_itemsize),
        transcendentals=0,
    )

    out = pl.pallas_call(
        _kan_proj_kernel,
        out_shape=jax.ShapeDtypeStruct((M, m_channels), out_dtype),
        grid_spec=pl.GridSpec(
            grid=grid,
            in_specs=[
                # x: one row tile per grid step (double-buffered by BlockSpec).
                pl.BlockSpec((tm, in_dim), lambda i: (i, 0)),
                # weight / bias: tiny, resident across the whole row grid.
                pl.BlockSpec((in_dim, m_channels), lambda i: (0, 0)),
                pl.BlockSpec((1, m_channels), lambda i: (0, 0)),
            ],
            out_specs=pl.BlockSpec((tm, m_channels), lambda i: (i, 0)),
        ),
        compiler_params=pltpu.CompilerParams(
            dimension_semantics=("parallel",),   # row tiles independent (v7x)
            vmem_limit_bytes=vmem_limit,
        ),
        cost_estimate=cost,
    )(x2, w_t, b2)

    return out.reshape(*lead, m_channels)


if __name__ == "__main__":
    # Small shapes consistent with the module: in_dim=32, m_channels=16,
    # input x of shape (batch=2, seq=8, in_dim=32).
    in_dim = 32
    m_channels = 16
    batch, seq = 2, 8

    key = jax.random.PRNGKey(0)
    kx, kw, kb = jax.random.split(key, 3)

    # Deterministic init mimicking nn.Linear's uniform(-1/sqrt(in), 1/sqrt(in)).
    bound = 1.0 / (in_dim ** 0.5)
    weight = jax.random.uniform(kw, (m_channels, in_dim), jnp.float32, -bound, bound)
    bias = jax.random.uniform(kb, (m_channels,), jnp.float32, -bound, bound)
    x = jax.random.normal(kx, (batch, seq, in_dim), jnp.float32)

    y_ref = x @ weight.T + bias

    # Exact f32 path (compute_dtype=None): matches the reference tightly.
    y32 = kan_projection(x, weight, bias, compute_dtype=None, use_pallas=True)
    jax.block_until_ready(y32)
    assert y32.shape == (batch, seq, m_channels)
    assert jnp.allclose(y32, y_ref, atol=1e-5, rtol=1e-5)

    # Default bf16-input path (f32 accumulation): looser tolerance by design.
    y16 = kan_projection(x, weight, bias, use_pallas=True)
    jax.block_until_ready(y16)
    assert y16.shape == (batch, seq, m_channels)
    assert jnp.allclose(y16, y_ref, atol=3e-2, rtol=3e-2)

    print("KERNEL_OK")
</pallas_src>

<mosaic_0001>
module attributes {stable_mosaic.version = 11 : i64} {
  func.func @_kan_proj_kernel(%arg0: i32, %arg1: memref<16x32xf32, #tpu.memory_space<vmem>>, %arg2: memref<32x16xf32, #tpu.memory_space<vmem>>, %arg3: memref<1x16xf32, #tpu.memory_space<vmem>>, %arg4: memref<16x16xf32, #tpu.memory_space<vmem>>) attributes {dimension_semantics = [#tpu.dimension_semantics<parallel>], iteration_bounds = array<i64: 1>, scalar_prefetch = 0 : i64, scratch_operands = 0 : i64, tpu.core_type = #tpu.core_type<tc>, window_params = [{transform_indices = @transform_0, window_bounds = array<i64: 16, 32>}, {pipeline_mode = #tpu.pipeline_mode<synchronous>, transform_indices = @transform_1, window_bounds = array<i64: 32, 16>}, {pipeline_mode = #tpu.pipeline_mode<synchronous>, transform_indices = @transform_2, window_bounds = array<i64: 1, 16>}, {transform_indices = @transform_3, window_bounds = array<i64: 16, 16>}]} {
    %c0 = arith.constant 0 : index
    %c0_0 = arith.constant 0 : index
    %0 = vector.load %arg1[%c0, %c0_0] : memref<16x32xf32, #tpu.memory_space<vmem>>, vector<16x32xf32>
    %c0_1 = arith.constant 0 : index
    %c0_2 = arith.constant 0 : index
    %1 = vector.load %arg2[%c0_1, %c0_2] : memref<32x16xf32, #tpu.memory_space<vmem>>, vector<32x16xf32>
    %cst = arith.constant dense<0.000000e+00> : vector<16x16xf32>
    %2 = tpu.matmul %0, %1, %cst {dimension_numbers = #tpu.dot_dimension_numbers<[1], [0], [0], [1], [0, 0, 1, 1], [], []>} : vector<16x32xf32>, vector<32x16xf32>, vector<16x16xf32> -> vector<16x16xf32>
    %c0_3 = arith.constant 0 : index
    %c0_4 = arith.constant 0 : index
    %3 = vector.load %arg3[%c0_3, %c0_4] : memref<1x16xf32, #tpu.memory_space<vmem>>, vector<1x16xf32>
    %4 = vector.broadcast %3 : vector<1x16xf32> to vector<16x16xf32>
    %5 = arith.addf %2, %4 : vector<16x16xf32>
    %c0_5 = arith.constant 0 : index
    %c0_6 = arith.constant 0 : index
    %6 = vector.load %arg4[%c0_5, %c0_6] : memref<16x16xf32, #tpu.memory_space<vmem>>, vector<16x16xf32>
    tpu.vector_store %arg4[%c0_5, %c0_6], %5 {strides = array<i32>} : memref<16x16xf32, #tpu.memory_space<vmem>>, vector<16x16xf32>,
    return
  }
  func.func @transform_0(%arg0: i32) -> (i32, i32) {
    %c0_i32 = arith.constant 0 : i32
    %c0_i32_0 = arith.constant 0 : i32
    return %arg0, %c0_i32 : i32, i32
  }
  func.func @transform_1(%arg0: i32) -> (i32, i32) {
    %c0_i32 = arith.constant 0 : i32
    %c0_i32_0 = arith.constant 0 : i32
    %c0_i32_1 = arith.constant 0 : i32
    return %c0_i32, %c0_i32_0 : i32, i32
  }
  func.func @transform_2(%arg0: i32) -> (i32, i32) {
    %c0_i32 = arith.constant 0 : i32
    %c0_i32_0 = arith.constant 0 : i32
    %c0_i32_1 = arith.constant 0 : i32
    return %c0_i32, %c0_i32_0 : i32, i32
  }
  func.func @transform_3(%arg0: i32) -> (i32, i32) {
    %c0_i32 = arith.constant 0 : i32
    %c0_i32_0 = arith.constant 0 : i32
    return %arg0, %c0_i32 : i32, i32
  }
}

</mosaic_0001>

<llo_original>
// kernel: kan_projection.1
$region0: #{kan_projection.1}
  #allocation0 [shape = 'u32[]', space=smem, size = 0x4, offset = 0x4, fixed_abs, tag = 'smem constant byte address 0x4 - core index']
  #allocation1 [shape = 'u32[144,128]{1,0:T(1,128)}', space=vmem, size = 0x12000, scoped, tag = 'internal scratch']
  %s0 = inlined_call_operand.vmem [shape: f32[16,32], index: 0, kind: input, shape index: {}]
  %s1 = inlined_call_operand.vmem [shape: f32[32,16], index: 1, kind: input, shape index: {}]
  %s2 = inlined_call_operand.vmem [shape: f32[1,16], index: 2, kind: input, shape index: {}]
  %s3 = inlined_call_operand.hbm [shape: f32[16,16], index: 3, kind: output, shape index: {}]
  %s4 = sld [smem:[#allocation0]]
  $region22: #{kan_projection.1} parent=0
    _
  %s6 = ssub.s32 1, %s4
  %s7 = scalar_select 0, %s6, %s4
  $region1: #{kan_projection.1} parent=0
    #allocation2 [shape = 'u8[8192]{0}', space=vmem, size = 0x2000, scoped, tag = 'output window, operand 0, single buffered']
    #allocation3 [shape = 's32[1]{0}', space=sflag, size = 0x4, scoped, tag = 'scoped memory for kan_projection.1']
    %8 = vsyncpa [#allocation3], 0
    // Predicated region
    $region2: #{kan_projection.1} parent=1 // pred_check
      _
    $region3: #{kan_projection.1} parent=1 // pred_check_branch
      %10 = sbr.rel (0) target = $region5
    $region4: #{kan_projection.1} parent=1 // pred_region
      _
    $region5: #{kan_projection.1} parent=1 // pred_fallthru
      _
    // Predicated region
    $region6: #{kan_projection.1} parent=1 // pred_check
      _
    $region7: #{kan_projection.1} parent=1 // pred_check_branch
      %12 = sbr.rel (0) target = $region9
    $region8: #{kan_projection.1} parent=1 // pred_region
      _
    $region9: #{kan_projection.1} parent=1 // pred_fallthru
      _
    // Predicated region
    $region10: #{kan_projection.1} parent=1 // pred_check
      _
    $region11: #{kan_projection.1} parent=1 // pred_check_branch
      %14 = sbr.rel (0) target = $region13
    $region12: #{kan_projection.1} parent=1 // pred_region
      _
    $region13: #{kan_projection.1} parent=1 // pred_fallthru
      _
    %v15 = vld [vmem:[%s0] sm:$0xff]
    %v16 = vld [vmem:[%s0 + $0x8] sm:$0xff]
    %v17 = vld [vmem:[%s1] sm:$0xff]
    %v18 = vld [vmem:[%s1 + $0x8] sm:$0xff]
    %v19 = vld [vmem:[%s1 + $0x10] sm:$0xff]
    %v20 = vld [vmem:[%s1 + $0x18] sm:$0xff]
    %v21 = vld [vmem:[%s2] sm:$0x1]
    %v23 = vlaneseq
    %v24 = vshrl.u32 %v23, 7
    %v25 = vsub.s32 0, %v24
    %v26 = vrot.slane %v21, %v25
    %vm28 = vcmask 261120
    %v30 = vsel %vm28, %v15, 0
    %v33 = vsel %vm28, %v16, 0
    %35 = vmatprep.subr.mxu0 0.0
    %36 = vmatpush1.msra.mxu0 0.0
    %37 = vmatprep.subr.mxu0 0.0
    %38 = vmatpush1.msra.mxu0 0.0
    %39 = vmatprep.subr.mxu0 0.0
    %40 = vmatpush1.msra.mxu0 0.0
    %41 = vmatprep.subr.mxu0 0.0
    %42 = vmatpush1.msra.mxu0 0.0
    %43 = vmatprep.subr.mxu0 0.0
    %44 = vmatpush1.msra.mxu0 0.0
    %45 = vmatprep.subr.mxu0 0.0
    %46 = vmatpush1.msra.mxu0 0.0
    %47 = vmatprep.subr.mxu0 0.0
    %48 = vmatpush1.msra.mxu0 0.0
    %49 = vmatprep.subr.mxu0 0.0
    %50 = vmatpush1.msra.mxu0 0.0
    %51 = vmatprep.subr.mxu0 0.0
    %52 = vmatpush1.msra.mxu0 0.0
    %53 = vmatprep.subr.mxu0 0.0
    %54 = vmatpush1.msra.mxu0 0.0
    %55 = vmatprep.subr.mxu0 0.0
    %56 = vmatpush1.msra.mxu0 0.0
    %57 = vmatprep.subr.mxu0 0.0
    %58 = vmatpush1.msra.mxu0 0.0
    %59 = vmatprep.subr.mxu0 0.0
    %60 = vmatpush1.msra.mxu0 %v20
    %61 = vmatprep.subr.mxu0 0.0
    %62 = vmatpush1.msra.mxu0 %v19
    %63 = vmatprep.subr.mxu0 0.0
    %64 = vmatpush1.msra.mxu0 %v18
    %65 = vmatprep.subr.mxu0 0.0
    %66 = vmatpush1.msra.mxu0 %v17
    %67 = vmatprep.subr.mxu0 0.0
    %68 = vmatpush2.msra.mxu0 0.0
    %69 = vmatprep.subr.mxu0 0.0
    %70 = vmatpush2.msra.mxu0 0.0
    %71 = vmatprep.subr.mxu0 0.0
    %72 = vmatpush2.msra.mxu0 0.0
    %73 = vmatprep.subr.mxu0 0.0
    %74 = vmatpush2.msra.mxu0 0.0
    %75 = vmatprep.subr.mxu0 0.0
    %76 = vmatpush2.msra.mxu0 0.0
    %77 = vmatprep.subr.mxu0 0.0
    %78 = vmatpush2.msra.mxu0 0.0
    %79 = vmatprep.subr.mxu0 0.0
    %80 = vmatpush2.msra.mxu0 0.0
    %81 = vmatprep.subr.mxu0 0.0
    %82 = vmatpush2.msra.mxu0 0.0
    %83 = vmatprep.subr.mxu0 0.0
    %84 = vmatpush2.msra.mxu0 0.0
    %85 = vmatprep.subr.mxu0 0.0
    %86 = vmatpush2.msra.mxu0 0.0
    %87 = vmatprep.subr.mxu0 0.0
    %88 = vmatpush2.msra.mxu0 0.0
    %89 = vmatprep.subr.mxu0 0.0
    %90 = vmatpush2.msra.mxu0 0.0
    %91 = vmatprep.subr.mxu0 0.0
    %92 = vmatpush2.msra.mxu0 0.0
    %93 = vmatprep.subr.mxu0 0.0
    %94 = vmatpush2.msra.mxu0 0.0
    %95 = vmatprep.subr.mxu0 0.0
    %96 = vmatpush2.msra.mxu0 0.0
    %97 = vmatprep.subr.mxu0 0.0
    %98 = vmatpush2.msra.mxu0 0.0
    %99 = vmatprep.mubr.f32.mxu0 0.0
    %100 = vmatmul.mubr.f32.gmra.mxu0 %v30
    %v101 = vpop.f32.mrf.mxu0
    %v102 = vadd.f32 %v26, %v101
    %v103 = vpop.f32.mrf.mxu0
    %104 = vmatprep.mubr.f32.mxu0 0.0
    %105 = vmatmul.mubr.f32.gmra.mxu0 %v33
    %v106 = vpop.f32.mrf.mxu0
    %v107 = vadd.f32 %v26, %v106
    %v108 = vpop.f32.mrf.mxu0
    %109 = vdwg.mxu0
    %vm110 = vcmask 130048
    %111 = vst.msk [vmem:[#allocation2] sm:$0xff] %vm110, %v102
    %112 = vst.msk [vmem:[#allocation2 + $0x8] sm:$0xff] %vm110, %v107
    // Predicated region
    $region14: #{kan_projection.1} parent=1 // pred_check
      _
    $region15: #{kan_projection.1} parent=1 // pred_check_branch
      %114 = sbr.rel (0) target = $region17
    $region16: #{kan_projection.1} parent=1 // pred_region
      %s116 = ssub.s32 256, 256
      %117 = vsyncadd [#allocation3], %s116
      %s118 = sshll.u32 [#allocation2], 4
      %s119 = int_to_ptr.vmem [resolvable:$true] %s118
      %124 = dma.vmem_to_hbm [thread:$0]  %s119, 256, %s3, [#allocation3], 128, 128, 8
    $region17: #{kan_projection.1} parent=1 // pred_fallthru
      _
    // Predicated region
    $region18: #{kan_projection.1} parent=1 // pred_check
      _
    $region19: #{kan_projection.1} parent=1 // pred_check_branch
      %126 = sbr.rel (0) target = $region21
    $region20: #{kan_projection.1} parent=1 // pred_region
      %127 = dma.done [#allocation3], 256
    $region21: #{kan_projection.1} parent=1 // pred_fallthru
      _
    %128 = vsyncpa [#allocation3], 1

</llo_original>
